<compile_context>
chip_gen: v5e
topology: v5e:2x2
jax: 0.10.0
libtpu: 0.0.40
codegen_flags: <defaults>
</compile_context>

<pallas_src>
import jax
import jax.numpy as jnp
from jax.experimental import pallas as pl
from jax.experimental.pallas import tpu as pltpu

LANE = 128
SUBLANE = 8
NEG_INF = -1e30  # fill for padded action lanes (avoids inf-inf NaN risk)


def _round_up(n, m):
    return ((n + m - 1) // m) * m


def _cdiv(a, b):
    return (a + b - 1) // b


# --------------------------------------------------------------------------
# Kernel
# --------------------------------------------------------------------------
def policy_kernel(x_ref, w1_ref, b1_ref, w2_ref, b2_ref, w3_ref, b3_ref,
                  probs_ref):
    # One (tile_b, state_size) slab of activations; cast to the MXU dtype
    # in-kernel so the wrapper never re-writes a padded/cast copy of x to HBM.
    x = x_ref[...].astype(w1_ref.dtype)

    # linear1 + relu  (bf16 MXU inputs, f32 accumulate / elementwise)
    h1 = jnp.dot(x, w1_ref[...], preferred_element_type=jnp.float32)
    h1 = jnp.maximum(h1 + b1_ref[...], 0.0)

    # linear2 + relu
    h2 = jnp.dot(h1.astype(w2_ref.dtype), w2_ref[...],
                 preferred_element_type=jnp.float32)
    h2 = jnp.maximum(h2 + b2_ref[...], 0.0)

    # linear3 -> logits.  b3 carries NEG_INF in padded action lanes, so those
    # lanes contribute ~0 to the softmax.
    logits = jnp.dot(h2.astype(w3_ref.dtype), w3_ref[...],
                     preferred_element_type=jnp.float32)
    logits = logits + b3_ref[...]

    # numerically-stable softmax over lanes -> Categorical probability table
    m = jnp.max(logits, axis=-1, keepdims=True)
    e = jnp.exp(logits - m)
    denom = jnp.sum(e, axis=-1, keepdims=True)
    probs = e * pl.reciprocal(denom, approx=False)
    probs_ref[...] = probs.astype(probs_ref.dtype)


# --------------------------------------------------------------------------
# One-time parameter preparation (hoisted out of the forward call)
# --------------------------------------------------------------------------
def prepare_policy_params(params, *, mxu_dtype=jnp.bfloat16):
    """Pad + cast weights/biases once; reuse the result across forward calls."""
    w1, b1, w2, b2, w3, b3 = params                 # weights already (in, out)
    state_size, hidden_size = w1.shape
    action_size = w3.shape[1]

    # 256-wide tiles feed v6e/v7x's 2x256^2 MXU once hidden grows past 128;
    # 128 matches v5e's 4x128^2 MXU and is enough at small sizes.
    hid_mult = 256 if hidden_size > 128 else LANE
    hp = _round_up(hidden_size, hid_mult)
    ap = _round_up(action_size, LANE)

    def pad2(a, r, c):
        return jnp.pad(a, ((0, r - a.shape[0]), (0, c - a.shape[1])))

    # Lane-dense bf16 weights.  w1 keeps its true K (= state_size); the MXU
    # pads small contraction dims internally, so x never needs lane padding.
    w1p = pad2(w1, state_size, hp).astype(mxu_dtype)
    w2p = pad2(w2, hp, hp).astype(mxu_dtype)
    w3p = pad2(w3, hp, ap).astype(mxu_dtype)
    b1p = pad2(b1.reshape(1, -1).astype(jnp.float32), 1, hp)
    b2p = pad2(b2.reshape(1, -1).astype(jnp.float32), 1, hp)
    b3p = jnp.full((1, ap), NEG_INF, jnp.float32).at[:, :action_size].set(
        b3.reshape(1, -1).astype(jnp.float32))

    meta = dict(state_size=state_size, hidden_size=hidden_size,
                action_size=action_size, hp=hp, ap=ap)
    return (w1p, b1p, w2p, b2p, w3p, b3p), meta


# --------------------------------------------------------------------------
# Forward
# --------------------------------------------------------------------------
def policy_forward(x, prepared_params, meta, *, tile_b=4096,
                   out_dtype=jnp.bfloat16, return_padded=False):
    """Returns Categorical probabilities, shape (batch, action_size)
    (or the padded (batch, ap) slab if return_padded=True)."""
    w1p, b1p, w2p, b2p, w3p, b3p = prepared_params
    batch, state_size = x.shape
    assert state_size == meta["state_size"]
    hp, ap = meta["hp"], meta["ap"]

    # Batch tiling: big tiles amortize the ~0.35us/step overhead, but keep
    # >=2 grid steps when the batch allows so v7x's 2nd TensorCore gets work.
    # Tile stays a multiple of the 8-row sublane granule.
    half = _round_up(_cdiv(batch, 2), SUBLANE)
    tile_b = max(SUBLANE, min(tile_b, half))
    grid = (_cdiv(batch, tile_b),)

    # VMEM budget estimate (double-buffered IO tiles + weights + f32 working
    # set), clamped to [32 MiB, 48 MiB] so it never shrinks the default scoped
    # limit and stays inside v7x's 64 MiB physical VMEM.
    nbytes = lambda a: a.size * a.dtype.itemsize
    weight_bytes = sum(nbytes(a) for a in (w1p, b1p, w2p, b2p, w3p, b3p))
    io_bytes = tile_b * (state_size * x.dtype.itemsize
                         + ap * jnp.dtype(out_dtype).itemsize)
    act_bytes = tile_b * (2 * hp + 3 * ap) * 4
    est = 2 * weight_bytes + 2 * io_bytes + act_bytes
    vmem_limit = int(min(max(2 * est, 32 * 2**20), 48 * 2**20))

    def build(weight_buffers):
        def resident(arr):
            kwargs = {}
            if weight_buffers is not None:
                kwargs["pipeline_mode"] = pl.Buffered(buffer_count=weight_buffers)
            return pl.BlockSpec(arr.shape, lambda i: (0,) * arr.ndim, **kwargs)

        return pl.pallas_call(
            policy_kernel,
            out_shape=jax.ShapeDtypeStruct((batch, ap), out_dtype),
            grid=grid,
            in_specs=[pl.BlockSpec((tile_b, state_size), lambda i: (i, 0)),
                      resident(w1p), resident(b1p),
                      resident(w2p), resident(b2p),
                      resident(w3p), resident(b3p)],
            out_specs=pl.BlockSpec((tile_b, ap), lambda i: (i, 0)),
            compiler_params=pltpu.CompilerParams(
                dimension_semantics=("parallel",),
                vmem_limit_bytes=vmem_limit),
        )

    args = (x, w1p, b1p, w2p, b2p, w3p, b3p)
    try:
        # Single-buffer the VMEM-resident weights/biases (constant index_map ->
        # value never changes), halving their VMEM footprint on v7x.
        probs = build(1)(*args)
    except Exception:
        # This jax version does not accept Buffered(1) here; fall back to the
        # default double-buffered resident specs (correct, slightly more VMEM).
        probs = build(None)(*args)

    if return_padded:
        return probs                     # (batch, ap) -- padded action lanes hold ~0
    return probs[:, :meta["action_size"]]


# --------------------------------------------------------------------------
# Init + pure-JAX reference
# --------------------------------------------------------------------------
def orthogonal(key, out_features, in_features):
    """Deterministic orthogonal init matching nn.init.orthogonal_ semantics
    (weight shape (out, in)); returned already transposed to (in, out)."""
    rows, cols = out_features, in_features
    flat = jax.random.normal(key, (max(rows, cols), min(rows, cols)),
                             dtype=jnp.float32)
    q, r = jnp.linalg.qr(flat)
    q = q * jnp.sign(jnp.diag(r))
    if rows < cols:
        q = q.T
    w = q[:rows, :cols]            # (out, in), orthogonal rows/cols
    return w.T                     # (in, out) for x @ W layout


def init_policy_params(key, state_size, action_size, hidden_size):
    k1, k2, k3 = jax.random.split(key, 3)
    w1 = orthogonal(k1, hidden_size, state_size)     # (state, hidden)
    w2 = orthogonal(k2, hidden_size, hidden_size)    # (hidden, hidden)
    w3 = orthogonal(k3, action_size, hidden_size)    # (hidden, action)
    b1 = jnp.zeros((1, hidden_size), jnp.float32)
    b2 = jnp.zeros((1, hidden_size), jnp.float32)
    b3 = jnp.zeros((1, action_size), jnp.float32)
    return (w1, b1, w2, b2, w3, b3)


def policy_reference(x, params, mxu_dtype=jnp.bfloat16):
    """Pure-JAX reference of the forward (Categorical probs), with the same
    bf16-rounding of MXU inputs as the kernel.  NOTE: this deviates from a
    pure-f32 PyTorch Policy by ~1e-2 relative on logits (bf16 MXU inputs)."""
    w1, b1, w2, b2, w3, b3 = params
    c = lambda a: a.astype(mxu_dtype).astype(jnp.float32)
    h1 = jax.nn.relu(c(x) @ c(w1) + b1)
    h2 = jax.nn.relu(c(h1) @ c(w2) + b2)
    logits = c(h2) @ c(w3) + b3
    return jax.nn.softmax(logits, axis=-1)


if __name__ == "__main__":
    state_size, action_size, hidden_size = 16, 8, 32
    batch = 8

    key = jax.random.PRNGKey(0)
    kx, kp = jax.random.split(key)
    x = jax.random.normal(kx, (batch, state_size), dtype=jnp.float32)
    params = init_policy_params(kp, state_size, action_size, hidden_size)

    # one-time pad + bf16 cast of the weights (hoisted out of the forward)
    prepared, meta = prepare_policy_params(params)

    ref = policy_reference(x, params)

    # f32-output run: tight check of the kernel math.
    probs_f32 = jax.block_until_ready(
        policy_forward(x, prepared, meta, out_dtype=jnp.float32))
    assert probs_f32.shape == (batch, action_size)
    assert jnp.allclose(probs_f32, ref, atol=1e-5, rtol=1e-5), "f32 mismatch vs reference"
    assert jnp.allclose(jnp.sum(probs_f32, axis=-1), 1.0, atol=1e-5), "f32 probs not normalized"

    # default run (bf16 output: half the HBM writeback) -> relaxed tolerances.
    probs = jax.block_until_ready(policy_forward(x, prepared, meta))
    probs32 = probs.astype(jnp.float32)
    assert probs.shape == (batch, action_size)
    assert jnp.allclose(probs32, ref, atol=1e-2), "bf16 mismatch vs reference"
    assert jnp.allclose(jnp.sum(probs32, axis=-1), 1.0, atol=1e-2), "bf16 probs not normalized"

    # TODO(synk): torch.distributions.Categorical itself (sampling/log_prob API)
    # has no Pallas equivalent; the kernel returns its probability table.
    print("KERNEL_OK")
</pallas_src>

<mosaic_0001>
module attributes {stable_mosaic.version = 11 : i64} {
  func.func @policy_kernel(%arg0: i32, %arg1: memref<8x16xf32, #tpu.memory_space<vmem>>, %arg2: memref<16x128xbf16, #tpu.memory_space<vmem>>, %arg3: memref<1x128xf32, #tpu.memory_space<vmem>>, %arg4: memref<128x128xbf16, #tpu.memory_space<vmem>>, %arg5: memref<1x128xf32, #tpu.memory_space<vmem>>, %arg6: memref<128x128xbf16, #tpu.memory_space<vmem>>, %arg7: memref<1x128xf32, #tpu.memory_space<vmem>>, %arg8: memref<8x128xf32, #tpu.memory_space<vmem>>) attributes {dimension_semantics = [#tpu.dimension_semantics<parallel>], iteration_bounds = array<i64: 1>, scalar_prefetch = 0 : i64, scratch_operands = 0 : i64, tpu.core_type = #tpu.core_type<tc>, window_params = [{transform_indices = @transform_0, window_bounds = array<i64: 8, 16>}, {pipeline_mode = #tpu.pipeline_mode<synchronous>, transform_indices = @transform_1, window_bounds = array<i64: 16, 128>}, {pipeline_mode = #tpu.pipeline_mode<synchronous>, transform_indices = @transform_2, window_bounds = array<i64: 1, 128>}, {pipeline_mode = #tpu.pipeline_mode<synchronous>, transform_indices = @transform_3, window_bounds = array<i64: 128, 128>}, {pipeline_mode = #tpu.pipeline_mode<synchronous>, transform_indices = @transform_4, window_bounds = array<i64: 1, 128>}, {pipeline_mode = #tpu.pipeline_mode<synchronous>, transform_indices = @transform_5, window_bounds = array<i64: 128, 128>}, {pipeline_mode = #tpu.pipeline_mode<synchronous>, transform_indices = @transform_6, window_bounds = array<i64: 1, 128>}, {transform_indices = @transform_7, window_bounds = array<i64: 8, 128>}]} {
    %c0 = arith.constant 0 : index
    %c0_0 = arith.constant 0 : index
    %0 = vector.load %arg1[%c0, %c0_0] : memref<8x16xf32, #tpu.memory_space<vmem>>, vector<8x16xf32>
    %1 = arith.truncf %0 : vector<8x16xf32> to vector<8x16xbf16>
    %c0_1 = arith.constant 0 : index
    %c0_2 = arith.constant 0 : index
    %2 = vector.load %arg2[%c0_1, %c0_2] : memref<16x128xbf16, #tpu.memory_space<vmem>>, vector<16x128xbf16>
    %cst = arith.constant dense<0.000000e+00> : vector<8x128xf32>
    %3 = tpu.matmul %1, %2, %cst {dimension_numbers = #tpu.dot_dimension_numbers<[1], [0], [0], [1], [0, 0, 1, 1], [], []>} : vector<8x16xbf16>, vector<16x128xbf16>, vector<8x128xf32> -> vector<8x128xf32>
    %c0_3 = arith.constant 0 : index
    %c0_4 = arith.constant 0 : index
    %4 = vector.load %arg3[%c0_3, %c0_4] : memref<1x128xf32, #tpu.memory_space<vmem>>, vector<1x128xf32>
    %5 = vector.broadcast %4 : vector<1x128xf32> to vector<8x128xf32>
    %6 = arith.addf %3, %5 : vector<8x128xf32>
    %cst_5 = arith.constant 0.000000e+00 : f32
    %7 = vector.broadcast %cst_5 : f32 to vector<8x128xf32>
    %8 = arith.maximumf %6, %7 : vector<8x128xf32>
    %9 = arith.truncf %8 : vector<8x128xf32> to vector<8x128xbf16>
    %c0_6 = arith.constant 0 : index
    %c0_7 = arith.constant 0 : index
    %10 = vector.load %arg4[%c0_6, %c0_7] : memref<128x128xbf16, #tpu.memory_space<vmem>>, vector<128x128xbf16>
    %cst_8 = arith.constant dense<0.000000e+00> : vector<8x128xf32>
    %11 = tpu.matmul %9, %10, %cst_8 {dimension_numbers = #tpu.dot_dimension_numbers<[1], [0], [0], [1], [0, 0, 1, 1], [], []>} : vector<8x128xbf16>, vector<128x128xbf16>, vector<8x128xf32> -> vector<8x128xf32>
    %c0_9 = arith.constant 0 : index
    %c0_10 = arith.constant 0 : index
    %12 = vector.load %arg5[%c0_9, %c0_10] : memref<1x128xf32, #tpu.memory_space<vmem>>, vector<1x128xf32>
    %13 = vector.broadcast %12 : vector<1x128xf32> to vector<8x128xf32>
    %14 = arith.addf %11, %13 : vector<8x128xf32>
    %cst_11 = arith.constant 0.000000e+00 : f32
    %15 = vector.broadcast %cst_11 : f32 to vector<8x128xf32>
    %16 = arith.maximumf %14, %15 : vector<8x128xf32>
    %17 = arith.truncf %16 : vector<8x128xf32> to vector<8x128xbf16>
    %c0_12 = arith.constant 0 : index
    %c0_13 = arith.constant 0 : index
    %18 = vector.load %arg6[%c0_12, %c0_13] : memref<128x128xbf16, #tpu.memory_space<vmem>>, vector<128x128xbf16>
    %cst_14 = arith.constant dense<0.000000e+00> : vector<8x128xf32>
    %19 = tpu.matmul %17, %18, %cst_14 {dimension_numbers = #tpu.dot_dimension_numbers<[1], [0], [0], [1], [0, 0, 1, 1], [], []>} : vector<8x128xbf16>, vector<128x128xbf16>, vector<8x128xf32> -> vector<8x128xf32>
    %c0_15 = arith.constant 0 : index
    %c0_16 = arith.constant 0 : index
    %20 = vector.load %arg7[%c0_15, %c0_16] : memref<1x128xf32, #tpu.memory_space<vmem>>, vector<1x128xf32>
    %21 = vector.broadcast %20 : vector<1x128xf32> to vector<8x128xf32>
    %22 = arith.addf %19, %21 : vector<8x128xf32>
    %cst_17 = arith.constant dense<0xFF800000> : vector<8xf32>
    %23 = vector.multi_reduction <maximumf>, %22, %cst_17 [1] : vector<8x128xf32> to vector<8xf32>
    %24 = vector.shape_cast %23 : vector<8xf32> to vector<8x1xf32>
    %25 = vector.broadcast %24 : vector<8x1xf32> to vector<8x128xf32>
    %26 = arith.subf %22, %25 : vector<8x128xf32>
    %27 = math.exp %26 : vector<8x128xf32>
    %cst_18 = arith.constant dense<0.000000e+00> : vector<8xf32>
    %28 = vector.multi_reduction <add>, %27, %cst_18 [1] : vector<8x128xf32> to vector<8xf32>
    %29 = vector.shape_cast %28 : vector<8xf32> to vector<8x1xf32>
    %30 = tpu.reciprocal %29 : vector<8x1xf32> -> vector<8x1xf32>
    %31 = vector.broadcast %30 : vector<8x1xf32> to vector<8x128xf32>
    %32 = arith.mulf %27, %31 : vector<8x128xf32>
    %c0_19 = arith.constant 0 : index
    %c0_20 = arith.constant 0 : index
    %33 = vector.load %arg8[%c0_19, %c0_20] : memref<8x128xf32, #tpu.memory_space<vmem>>, vector<8x128xf32>
    tpu.vector_store %arg8[%c0_19, %c0_20], %32 {strides = array<i32>} : memref<8x128xf32, #tpu.memory_space<vmem>>, vector<8x128xf32>,
    return
  }
  func.func @transform_0(%arg0: i32) -> (i32, i32) {
    %c0_i32 = arith.constant 0 : i32
    %c0_i32_0 = arith.constant 0 : i32
    return %arg0, %c0_i32 : i32, i32
  }
  func.func @transform_1(%arg0: i32) -> (i32, i32) {
    %c0_i32 = arith.constant 0 : i32
    %c0_i32_0 = arith.constant 0 : i32
    %c0_i32_1 = arith.constant 0 : i32
    return %c0_i32, %c0_i32_0 : i32, i32
  }
  func.func @transform_2(%arg0: i32) -> (i32, i32) {
    %c0_i32 = arith.constant 0 : i32
    %c0_i32_0 = arith.constant 0 : i32
    %c0_i32_1 = arith.constant 0 : i32
    return %c0_i32, %c0_i32_0 : i32, i32
  }
  func.func @transform_3(%arg0: i32) -> (i32, i32) {
    %c0_i32 = arith.constant 0 : i32
    %c0_i32_0 = arith.constant 0 : i32
    %c0_i32_1 = arith.constant 0 : i32
    return %c0_i32, %c0_i32_0 : i32, i32
  }
  func.func @transform_4(%arg0: i32) -> (i32, i32) {
    %c0_i32 = arith.constant 0 : i32
    %c0_i32_0 = arith.constant 0 : i32
    %c0_i32_1 = arith.constant 0 : i32
    return %c0_i32, %c0_i32_0 : i32, i32
  }
  func.func @transform_5(%arg0: i32) -> (i32, i32) {
    %c0_i32 = arith.constant 0 : i32
    %c0_i32_0 = arith.constant 0 : i32
    %c0_i32_1 = arith.constant 0 : i32
    return %c0_i32, %c0_i32_0 : i32, i32
  }
  func.func @transform_6(%arg0: i32) -> (i32, i32) {
    %c0_i32 = arith.constant 0 : i32
    %c0_i32_0 = arith.constant 0 : i32
    %c0_i32_1 = arith.constant 0 : i32
    return %c0_i32, %c0_i32_0 : i32, i32
  }
  func.func @transform_7(%arg0: i32) -> (i32, i32) {
    %c0_i32 = arith.constant 0 : i32
    %c0_i32_0 = arith.constant 0 : i32
    return %arg0, %c0_i32 : i32, i32
  }
}

module attributes {stable_mosaic.version = 11 : i64} {
  func.func @policy_kernel(%arg0: i32, %arg1: memref<8x16xf32, #tpu.memory_space<vmem>>, %arg2: memref<16x128xbf16, #tpu.memory_space<vmem>>, %arg3: memref<1x128xf32, #tpu.memory_space<vmem>>, %arg4: memref<128x128xbf16, #tpu.memory_space<vmem>>, %arg5: memref<1x128xf32, #tpu.memory_space<vmem>>, %arg6: memref<128x128xbf16, #tpu.memory_space<vmem>>, %arg7: memref<1x128xf32, #tpu.memory_space<vmem>>, %arg8: memref<8x128xf32, #tpu.memory_space<vmem>>) attributes {dimension_semantics = [#tpu.dimension_semantics<parallel>], iteration_bounds = array<i64: 1>, scalar_prefetch = 0 : i64, scratch_operands = 0 : i64, tpu.core_type = #tpu.core_type<tc>, window_params = [{transform_indices = @transform_0, window_bounds = array<i64: 8, 16>}, {pipeline_mode = #tpu.pipeline_mode<synchronous>, transform_indices = @transform_1, window_bounds = array<i64: 16, 128>}, {pipeline_mode = #tpu.pipeline_mode<synchronous>, transform_indices = @transform_2, window_bounds = array<i64: 1, 128>}, {pipeline_mode = #tpu.pipeline_mode<synchronous>, transform_indices = @transform_3, window_bounds = array<i64: 128, 128>}, {pipeline_mode = #tpu.pipeline_mode<synchronous>, transform_indices = @transform_4, window_bounds = array<i64: 1, 128>}, {pipeline_mode = #tpu.pipeline_mode<synchronous>, transform_indices = @transform_5, window_bounds = array<i64: 128, 128>}, {pipeline_mode = #tpu.pipeline_mode<synchronous>, transform_indices = @transform_6, window_bounds = array<i64: 1, 128>}, {transform_indices = @transform_7, window_bounds = array<i64: 8, 128>}]} {
    %c0 = arith.constant 0 : index
    %c0_0 = arith.constant 0 : index
    %0 = vector.load %arg1[%c0, %c0_0] : memref<8x16xf32, #tpu.memory_space<vmem>>, vector<8x16xf32>
    %1 = arith.truncf %0 : vector<8x16xf32> to vector<8x16xbf16>
    %c0_1 = arith.constant 0 : index
    %c0_2 = arith.constant 0 : index
    %2 = vector.load %arg2[%c0_1, %c0_2] : memref<16x128xbf16, #tpu.memory_space<vmem>>, vector<16x128xbf16>
    %cst = arith.constant dense<0.000000e+00> : vector<8x128xf32>
    %3 = tpu.matmul %1, %2, %cst {dimension_numbers = #tpu.dot_dimension_numbers<[1], [0], [0], [1], [0, 0, 1, 1], [], []>} : vector<8x16xbf16>, vector<16x128xbf16>, vector<8x128xf32> -> vector<8x128xf32>
    %c0_3 = arith.constant 0 : index
    %c0_4 = arith.constant 0 : index
    %4 = vector.load %arg3[%c0_3, %c0_4] : memref<1x128xf32, #tpu.memory_space<vmem>>, vector<1x128xf32>
    %5 = vector.broadcast %4 : vector<1x128xf32> to vector<8x128xf32>
    %6 = arith.addf %3, %5 : vector<8x128xf32>
    %cst_5 = arith.constant 0.000000e+00 : f32
    %7 = vector.broadcast %cst_5 : f32 to vector<8x128xf32>
    %8 = arith.maximumf %6, %7 : vector<8x128xf32>
    %9 = arith.truncf %8 : vector<8x128xf32> to vector<8x128xbf16>
    %c0_6 = arith.constant 0 : index
    %c0_7 = arith.constant 0 : index
    %10 = vector.load %arg4[%c0_6, %c0_7] : memref<128x128xbf16, #tpu.memory_space<vmem>>, vector<128x128xbf16>
    %cst_8 = arith.constant dense<0.000000e+00> : vector<8x128xf32>
    %11 = tpu.matmul %9, %10, %cst_8 {dimension_numbers = #tpu.dot_dimension_numbers<[1], [0], [0], [1], [0, 0, 1, 1], [], []>} : vector<8x128xbf16>, vector<128x128xbf16>, vector<8x128xf32> -> vector<8x128xf32>
    %c0_9 = arith.constant 0 : index
    %c0_10 = arith.constant 0 : index
    %12 = vector.load %arg5[%c0_9, %c0_10] : memref<1x128xf32, #tpu.memory_space<vmem>>, vector<1x128xf32>
    %13 = vector.broadcast %12 : vector<1x128xf32> to vector<8x128xf32>
    %14 = arith.addf %11, %13 : vector<8x128xf32>
    %cst_11 = arith.constant 0.000000e+00 : f32
    %15 = vector.broadcast %cst_11 : f32 to vector<8x128xf32>
    %16 = arith.maximumf %14, %15 : vector<8x128xf32>
    %17 = arith.truncf %16 : vector<8x128xf32> to vector<8x128xbf16>
    %c0_12 = arith.constant 0 : index
    %c0_13 = arith.constant 0 : index
    %18 = vector.load %arg6[%c0_12, %c0_13] : memref<128x128xbf16, #tpu.memory_space<vmem>>, vector<128x128xbf16>
    %cst_14 = arith.constant dense<0.000000e+00> : vector<8x128xf32>
    %19 = tpu.matmul %17, %18, %cst_14 {dimension_numbers = #tpu.dot_dimension_numbers<[1], [0], [0], [1], [0, 0, 1, 1], [], []>} : vector<8x128xbf16>, vector<128x128xbf16>, vector<8x128xf32> -> vector<8x128xf32>
    %c0_15 = arith.constant 0 : index
    %c0_16 = arith.constant 0 : index
    %20 = vector.load %arg7[%c0_15, %c0_16] : memref<1x128xf32, #tpu.memory_space<vmem>>, vector<1x128xf32>
    %21 = vector.broadcast %20 : vector<1x128xf32> to vector<8x128xf32>
    %22 = arith.addf %19, %21 : vector<8x128xf32>
    %cst_17 = arith.constant dense<0xFF800000> : vector<8xf32>
    %23 = vector.multi_reduction <maximumf>, %22, %cst_17 [1] : vector<8x128xf32> to vector<8xf32>
    %24 = vector.shape_cast %23 : vector<8xf32> to vector<8x1xf32>
    %25 = vector.broadcast %24 : vector<8x1xf32> to vector<8x128xf32>
    %26 = arith.subf %22, %25 : vector<8x128xf32>
    %27 = math.exp %26 : vector<8x128xf32>
    %cst_18 = arith.constant dense<0.000000e+00> : vector<8xf32>
    %28 = vector.multi_reduction <add>, %27, %cst_18 [1] : vector<8x128xf32> to vector<8xf32>
    %29 = vector.shape_cast %28 : vector<8xf32> to vector<8x1xf32>
    %30 = tpu.reciprocal %29 : vector<8x1xf32> -> vector<8x1xf32>
    %31 = vector.broadcast %30 : vector<8x1xf32> to vector<8x128xf32>
    %32 = arith.mulf %27, %31 : vector<8x128xf32>
    %c0_19 = arith.constant 0 : index
    %c0_20 = arith.constant 0 : index
    %33 = vector.load %arg8[%c0_19, %c0_20] : memref<8x128xf32, #tpu.memory_space<vmem>>, vector<8x128xf32>
    tpu.vector_store %arg8[%c0_19, %c0_20], %32 {strides = array<i32>} : memref<8x128xf32, #tpu.memory_space<vmem>>, vector<8x128xf32>,
    return
  }
  func.func @transform_0(%arg0: i32) -> (i32, i32) {
    %c0_i32 = arith.constant 0 : i32
    %c0_i32_0 = arith.constant 0 : i32
    return %arg0, %c0_i32 : i32, i32
  }
  func.func @transform_1(%arg0: i32) -> (i32, i32) {
    %c0_i32 = arith.constant 0 : i32
    %c0_i32_0 = arith.constant 0 : i32
    %c0_i32_1 = arith.constant 0 : i32
    return %c0_i32, %c0_i32_0 : i32, i32
  }
  func.func @transform_2(%arg0: i32) -> (i32, i32) {
    %c0_i32 = arith.constant 0 : i32
    %c0_i32_0 = arith.constant 0 : i32
    %c0_i32_1 = arith.constant 0 : i32
    return %c0_i32, %c0_i32_0 : i32, i32
  }
  func.func @transform_3(%arg0: i32) -> (i32, i32) {
    %c0_i32 = arith.constant 0 : i32
    %c0_i32_0 = arith.constant 0 : i32
    %c0_i32_1 = arith.constant 0 : i32
    return %c0_i32, %c0_i32_0 : i32, i32
  }
  func.func @transform_4(%arg0: i32) -> (i32, i32) {
    %c0_i32 = arith.constant 0 : i32
    %c0_i32_0 = arith.constant 0 : i32
    %c0_i32_1 = arith.constant 0 : i32
    return %c0_i32, %c0_i32_0 : i32, i32
  }
  func.func @transform_5(%arg0: i32) -> (i32, i32) {
    %c0_i32 = arith.constant 0 : i32
    %c0_i32_0 = arith.constant 0 : i32
    %c0_i32_1 = arith.constant 0 : i32
    return %c0_i32, %c0_i32_0 : i32, i32
  }
  func.func @transform_6(%arg0: i32) -> (i32, i32) {
    %c0_i32 = arith.constant 0 : i32
    %c0_i32_0 = arith.constant 0 : i32
    %c0_i32_1 = arith.constant 0 : i32
    return %c0_i32, %c0_i32_0 : i32, i32
  }
  func.func @transform_7(%arg0: i32) -> (i32, i32) {
    %c0_i32 = arith.constant 0 : i32
    %c0_i32_0 = arith.constant 0 : i32
    return %arg0, %c0_i32 : i32, i32
  }
}

</mosaic_0001>

<llo_original>
// kernel: tpu_custom_call.1
$region0: #{tpu_custom_call.1}
  #allocation0 [shape = 'u32[]', space=smem, size = 0x4, offset = 0x4, fixed_abs, tag = 'smem constant byte address 0x4 - core index']
  #allocation1 [shape = 'u32[72,128]{1,0:T(1,128)}', space=vmem, size = 0x9000, scoped, tag = 'internal scratch']
  %s0 = inlined_call_operand.hbm [shape: f32[8,16], index: 0, kind: input, shape index: {}]
  %s1 = inlined_call_operand.hbm [shape: bf16[16,128], index: 1, kind: input, shape index: {}]
  %s2 = inlined_call_operand.vmem [shape: f32[1,128], index: 2, kind: input, shape index: {}]
  %s3 = inlined_call_operand.hbm [shape: bf16[128,128], index: 3, kind: input, shape index: {}]
  %s4 = inlined_call_operand.vmem [shape: f32[1,128], index: 4, kind: input, shape index: {}]
  %s5 = inlined_call_operand.hbm [shape: bf16[128,128], index: 5, kind: input, shape index: {}]
  %s6 = inlined_call_operand.vmem [shape: f32[1,128], index: 6, kind: input, shape index: {}]
  %s7 = inlined_call_operand.hbm [shape: f32[8,128], index: 7, kind: output, shape index: {}]
  %s8 = sld [smem:[#allocation0]]
  $region54: #{tpu_custom_call.1} parent=0
    _
  %s10 = ssub.s32 1, %s8
  %s11 = scalar_select 0, %s10, %s8
  $region1: #{tpu_custom_call.1} parent=0
    #allocation2 [shape = 'u8[4096]{0}', space=vmem, size = 0x1000, scoped, tag = 'input window, operand 0, single buffered']
    #allocation3 [shape = 's32[1]{0}', space=sflag, size = 0x4, scoped, tag = 'scoped memory for tpu_custom_call.1']
    #allocation4 [shape = 's32[1]{0}', space=sflag, size = 0x4, scoped, tag = 'scoped memory for tpu_custom_call.1']
    #allocation5 [shape = 'u8[4096]{0}', space=vmem, size = 0x1000, scoped, tag = 'input window, operand 1, single buffered']
    #allocation6 [shape = 's32[1]{0}', space=sflag, size = 0x4, scoped, tag = 'scoped memory for tpu_custom_call.1']
    #allocation7 [shape = 'u8[32768]{0}', space=vmem, size = 0x8000, scoped, tag = 'input window, operand 3, single buffered']
    #allocation8 [shape = 'u8[32768]{0}', space=vmem, size = 0x8000, scoped, tag = 'input window, operand 5, single buffered']
    #allocation9 [shape = 's32[1]{0}', space=sflag, size = 0x4, scoped, tag = 'scoped memory for tpu_custom_call.1']
    #allocation10 [shape = 'u8[4096]{0}', space=vmem, size = 0x1000, scoped, tag = 'output window, operand 0, single buffered']
    %12 = vsyncpa [#allocation3], 0
    %13 = vsyncpa [#allocation6], 0
    %14 = vsyncpa [#allocation9], 0
    %15 = vsyncpa [#allocation4], 0
    // Predicated region
    $region2: #{tpu_custom_call.1} parent=1 // pred_check
      _
    $region3: #{tpu_custom_call.1} parent=1 // pred_check_branch
      %17 = sbr.rel (0) target = $region5
    $region4: #{tpu_custom_call.1} parent=1 // pred_region
      %19 = vsyncadd [#allocation3], 0
      %s21 = sshll.u32 %s0, 4
      %s22 = int_to_ptr.hbm [resolvable:$true] %s21
      %s23 = sshll.u32 [#allocation2], 4
      %s24 = int_to_ptr.vmem [resolvable:$true] %s23
      %26 = dma.hbm_to_vmem [thread:$0]  %s22, 128, %s24, [#allocation3]
    $region5: #{tpu_custom_call.1} parent=1 // pred_fallthru
      _
    // Predicated region
    $region6: #{tpu_custom_call.1} parent=1 // pred_check
      _
    $region7: #{tpu_custom_call.1} parent=1 // pred_check_branch
      %28 = sbr.rel (0) target = $region9
    $region8: #{tpu_custom_call.1} parent=1 // pred_region
      %30 = vsyncadd [#allocation6], 0
      %s31 = sshll.u32 %s1, 4
      %s32 = int_to_ptr.hbm [resolvable:$true] %s31
      %s33 = sshll.u32 [#allocation5], 4
      %s34 = int_to_ptr.vmem [resolvable:$true] %s33
      %39 = dma.hbm_to_vmem [thread:$0]  %s32, 128, %s34, [#allocation6], 64, 64, 4
    $region9: #{tpu_custom_call.1} parent=1 // pred_fallthru
      _
    // Predicated region
    $region10: #{tpu_custom_call.1} parent=1 // pred_check
      _
    $region11: #{tpu_custom_call.1} parent=1 // pred_check_branch
      %41 = sbr.rel (0) target = $region13
    $region12: #{tpu_custom_call.1} parent=1 // pred_region
      _
    $region13: #{tpu_custom_call.1} parent=1 // pred_fallthru
      _
    // Predicated region
    $region14: #{tpu_custom_call.1} parent=1 // pred_check
      _
    $region15: #{tpu_custom_call.1} parent=1 // pred_check_branch
      %43 = sbr.rel (0) target = $region17
    $region16: #{tpu_custom_call.1} parent=1 // pred_region
      %45 = vsyncadd [#allocation6], 0
      %s46 = sshll.u32 %s3, 4
      %s47 = int_to_ptr.hbm [resolvable:$true] %s46
      %s48 = sshll.u32 [#allocation7], 4
      %s49 = int_to_ptr.vmem [resolvable:$true] %s48
      %54 = dma.hbm_to_vmem [thread:$0]  %s47, 1024, %s49, [#allocation6], 64, 64, 4
    $region17: #{tpu_custom_call.1} parent=1 // pred_fallthru
      _
    // Predicated region
    $region18: #{tpu_custom_call.1} parent=1 // pred_check
      _
    $region19: #{tpu_custom_call.1} parent=1 // pred_check_branch
      %56 = sbr.rel (0) target = $region21
    $region20: #{tpu_custom_call.1} parent=1 // pred_region
      _
    $region21: #{tpu_custom_call.1} parent=1 // pred_fallthru
      _
    // Predicated region
    $region22: #{tpu_custom_call.1} parent=1 // pred_check
      _
    $region23: #{tpu_custom_call.1} parent=1 // pred_check_branch
      %58 = sbr.rel (0) target = $region25
    $region24: #{tpu_custom_call.1} parent=1 // pred_region
      %60 = vsyncadd [#allocation9], 0
      %s61 = sshll.u32 %s5, 4
      %s62 = int_to_ptr.hbm [resolvable:$true] %s61
      %s63 = sshll.u32 [#allocation8], 4
      %s64 = int_to_ptr.vmem [resolvable:$true] %s63
      %69 = dma.hbm_to_vmem [thread:$0]  %s62, 1024, %s64, [#allocation9], 64, 64, 4
    $region25: #{tpu_custom_call.1} parent=1 // pred_fallthru
      _
    // Predicated region
    $region26: #{tpu_custom_call.1} parent=1 // pred_check
      _
    $region27: #{tpu_custom_call.1} parent=1 // pred_check_branch
      %71 = sbr.rel (0) target = $region29
    $region28: #{tpu_custom_call.1} parent=1 // pred_region
      _
    $region29: #{tpu_custom_call.1} parent=1 // pred_fallthru
      _
    // Predicated region
    $region30: #{tpu_custom_call.1} parent=1 // pred_check
      _
    $region31: #{tpu_custom_call.1} parent=1 // pred_check_branch
      %73 = sbr.rel (0) target = $region33
    $region32: #{tpu_custom_call.1} parent=1 // pred_region
      %75 = dma.done [#allocation3], 128
    $region33: #{tpu_custom_call.1} parent=1 // pred_fallthru
      _
    // Predicated region
    $region34: #{tpu_custom_call.1} parent=1 // pred_check
      _
    $region35: #{tpu_custom_call.1} parent=1 // pred_check_branch
      %77 = sbr.rel (0) target = $region37
    $region36: #{tpu_custom_call.1} parent=1 // pred_region
      %79 = dma.done [#allocation6], 128
    $region37: #{tpu_custom_call.1} parent=1 // pred_fallthru
      _
    // Predicated region
    $region38: #{tpu_custom_call.1} parent=1 // pred_check
      _
    $region39: #{tpu_custom_call.1} parent=1 // pred_check_branch
      %81 = sbr.rel (0) target = $region41
    $region40: #{tpu_custom_call.1} parent=1 // pred_region
      %83 = dma.done [#allocation6], 1024
    $region41: #{tpu_custom_call.1} parent=1 // pred_fallthru
      _
    // Predicated region
    $region42: #{tpu_custom_call.1} parent=1 // pred_check
      _
    $region43: #{tpu_custom_call.1} parent=1 // pred_check_branch
      %85 = sbr.rel (0) target = $region45
    $region44: #{tpu_custom_call.1} parent=1 // pred_region
      %87 = dma.done [#allocation9], 1024
    $region45: #{tpu_custom_call.1} parent=1 // pred_fallthru
      _
    %v89 = vld [vmem:[#allocation2] sm:$0xff]
    %v90 = vpack.c.bf16 %v89, %v89
    %v91 = vld [vmem:[#allocation5] sm:$0xf]
    %v92 = vld [vmem:[#allocation5 + $0x4] sm:$0xf]
    %v93 = vld [vmem:[%s2] sm:$0x1]
    %v95 = vperm.slane %v93, 0
    %v99 = vunpack.c.l.b16 %v91
    %v100 = vunpack.c.l.b16 %v92
    %v101 = vpack.c.b16 %v100, %v99
    %vm103 = vcmask 130048
    %v105 = vsel %vm103, %v90, 0
    %107 = vmatpush.bf16.msra.mxu0 0
    %108 = vmatpush.bf16.msra.mxu0 0
    %109 = vmatpush.bf16.msra.mxu0 0
    %110 = vmatpush.bf16.msra.mxu0 0
    %111 = vmatpush.bf16.msra.mxu0 0
    %112 = vmatpush.bf16.msra.mxu0 0
    %113 = vmatpush.bf16.msra.mxu0 0
    %114 = vmatpush.bf16.msra.mxu0 %v101
    %115 = vmatmul.bf16.gmra.mxu0 %v105
    %v116 = vpop.f32.mrf.mxu0
    %v117 = vadd.f32 %v95, %v116
    %v118 = vpop.f32.mrf.mxu0
    %119 = vdwg.mxu0
    %v120 = vmax.f32 %v117, 0.0
    %v121 = vpack.c.bf16 %v120, %v120
    %v122 = vld [vmem:[#allocation7] sm:$0xf]
    %v123 = vld [vmem:[#allocation7 + $0x4] sm:$0xf]
    %v124 = vld [vmem:[#allocation7 + $0x8] sm:$0xf]
    %v125 = vld [vmem:[#allocation7 + $0xc] sm:$0xf]
    %v126 = vld [vmem:[#allocation7 + $0x10] sm:$0xf]
    %v127 = vld [vmem:[#allocation7 + $0x14] sm:$0xf]
    %v128 = vld [vmem:[#allocation7 + $0x18] sm:$0xf]
    %v129 = vld [vmem:[#allocation7 + $0x1c] sm:$0xf]
    %v130 = vld [vmem:[#allocation7 + $0x20] sm:$0xf]
    %v131 = vld [vmem:[#allocation7 + $0x24] sm:$0xf]
    %v132 = vld [vmem:[#allocation7 + $0x28] sm:$0xf]
    %v133 = vld [vmem:[#allocation7 + $0x2c] sm:$0xf]
    %v134 = vld [vmem:[#allocation7 + $0x30] sm:$0xf]
    %v135 = vld [vmem:[#allocation7 + $0x34] sm:$0xf]
    %v136 = vld [vmem:[#allocation7 + $0x38] sm:$0xf]
    %v137 = vld [vmem:[#allocation7 + $0x3c] sm:$0xf]
    %v138 = vld [vmem:[%s4] sm:$0x1]
    %v140 = vperm.slane %v138, 0
    %v158 = vunpack.c.l.b16 %v122
    %v159 = vunpack.c.l.b16 %v123
    %v160 = vunpack.c.l.b16 %v124
    %v161 = vunpack.c.l.b16 %v125
    %v162 = vunpack.c.l.b16 %v126
    %v163 = vunpack.c.l.b16 %v127
    %v164 = vunpack.c.l.b16 %v128
    %v165 = vunpack.c.l.b16 %v129
    %v166 = vunpack.c.l.b16 %v130
    %v167 = vunpack.c.l.b16 %v131
    %v168 = vunpack.c.l.b16 %v132
    %v169 = vunpack.c.l.b16 %v133
    %v170 = vunpack.c.l.b16 %v134
    %v171 = vunpack.c.l.b16 %v135
    %v172 = vunpack.c.l.b16 %v136
    %v173 = vunpack.c.l.b16 %v137
    %v174 = vpack.c.b16 %v159, %v158
    %v175 = vpack.c.b16 %v161, %v160
    %v176 = vpack.c.b16 %v163, %v162
    %v177 = vpack.c.b16 %v165, %v164
    %v178 = vpack.c.b16 %v167, %v166
    %v179 = vpack.c.b16 %v169, %v168
    %v180 = vpack.c.b16 %v171, %v170
    %v181 = vpack.c.b16 %v173, %v172
    %190 = vmatpush.bf16.msra.mxu0 %v181
    %191 = vmatpush.bf16.msra.mxu0 %v180
    %192 = vmatpush.bf16.msra.mxu0 %v179
    %193 = vmatpush.bf16.msra.mxu0 %v178
    %194 = vmatpush.bf16.msra.mxu0 %v177
    %195 = vmatpush.bf16.msra.mxu0 %v176
    %196 = vmatpush.bf16.msra.mxu0 %v175
    %197 = vmatpush.bf16.msra.mxu0 %v174
    %198 = vmatmul.bf16.gmra.mxu0 %v121
    %v199 = vpop.f32.mrf.mxu0
    %v200 = vadd.f32 %v140, %v199
    %v201 = vpop.f32.mrf.mxu0
    %202 = vdwg.mxu0
    %v203 = vmax.f32 %v200, 0.0
    %v204 = vpack.c.bf16 %v203, %v203
    %v205 = vld [vmem:[#allocation8] sm:$0xf]
    %v206 = vld [vmem:[#allocation8 + $0x4] sm:$0xf]
    %v207 = vld [vmem:[#allocation8 + $0x8] sm:$0xf]
    %v208 = vld [vmem:[#allocation8 + $0xc] sm:$0xf]
    %v209 = vld [vmem:[#allocation8 + $0x10] sm:$0xf]
    %v210 = vld [vmem:[#allocation8 + $0x14] sm:$0xf]
    %v211 = vld [vmem:[#allocation8 + $0x18] sm:$0xf]
    %v212 = vld [vmem:[#allocation8 + $0x1c] sm:$0xf]
    %v213 = vld [vmem:[#allocation8 + $0x20] sm:$0xf]
    %v214 = vld [vmem:[#allocation8 + $0x24] sm:$0xf]
    %v215 = vld [vmem:[#allocation8 + $0x28] sm:$0xf]
    %v216 = vld [vmem:[#allocation8 + $0x2c] sm:$0xf]
    %v217 = vld [vmem:[#allocation8 + $0x30] sm:$0xf]
    %v218 = vld [vmem:[#allocation8 + $0x34] sm:$0xf]
    %v219 = vld [vmem:[#allocation8 + $0x38] sm:$0xf]
    %v220 = vld [vmem:[#allocation8 + $0x3c] sm:$0xf]
    %v221 = vld [vmem:[%s6] sm:$0x1]
    %v223 = vperm.slane %v221, 0
    %v241 = vunpack.c.l.b16 %v205
    %v242 = vunpack.c.l.b16 %v206
    %v243 = vunpack.c.l.b16 %v207
    %v244 = vunpack.c.l.b16 %v208
    %v245 = vunpack.c.l.b16 %v209
    %v246 = vunpack.c.l.b16 %v210
    %v247 = vunpack.c.l.b16 %v211
    %v248 = vunpack.c.l.b16 %v212
    %v249 = vunpack.c.l.b16 %v213
    %v250 = vunpack.c.l.b16 %v214
    %v251 = vunpack.c.l.b16 %v215
    %v252 = vunpack.c.l.b16 %v216
    %v253 = vunpack.c.l.b16 %v217
    %v254 = vunpack.c.l.b16 %v218
    %v255 = vunpack.c.l.b16 %v219
    %v256 = vunpack.c.l.b16 %v220
    %v257 = vpack.c.b16 %v242, %v241
    %v258 = vpack.c.b16 %v244, %v243
    %v259 = vpack.c.b16 %v246, %v245
    %v260 = vpack.c.b16 %v248, %v247
    %v261 = vpack.c.b16 %v250, %v249
    %v262 = vpack.c.b16 %v252, %v251
    %v263 = vpack.c.b16 %v254, %v253
    %v264 = vpack.c.b16 %v256, %v255
    %273 = vmatpush.bf16.msra.mxu0 %v264
    %274 = vmatpush.bf16.msra.mxu0 %v263
    %275 = vmatpush.bf16.msra.mxu0 %v262
    %276 = vmatpush.bf16.msra.mxu0 %v261
    %277 = vmatpush.bf16.msra.mxu0 %v260
    %278 = vmatpush.bf16.msra.mxu0 %v259
    %279 = vmatpush.bf16.msra.mxu0 %v258
    %280 = vmatpush.bf16.msra.mxu0 %v257
    %281 = vmatmul.bf16.gmra.mxu0 %v204
    %v282 = vpop.f32.mrf.mxu0
    %v283 = vadd.f32 %v223, %v282
    %v284 = vpop.f32.mrf.mxu0
    %285 = vdwg.mxu0
    %286 = vmax.xlane.f32.xlu0 %v283
    %v287 = vpop.xlane.xlu0 %286
    %v288 = vsub.f32 %v283, %v287
    %v289 = vmul.f32 %v288, 1.442695
    %v290 = vpow.pop %v289
    %291 = vadd.xlane.f32.xlu0 %v290
    %v292 = vpop.xlane.xlu0 %291
    %v293 = vrcp.pop %v292
    %v294 = vmul.f32 %v292, %v293
    %v295 = vsub.f32 1.0, %v294
    %v296 = vmul.f32 %v293, %v295
    %v297 = vadd.f32 %v293, %v296
    %vm298 = vweird.f32 %v292
    %vm299 = vweird.f32 %v293
    %vm300 = vmor %vm298, %vm299
    %v301 = vsel %vm300, %v293, %v297
    %v302 = vand.u32 2147483647, %v292
    %vm303 = vcmp.eq.f32.partialorder %v302, 8.507059e+37
    %v304 = vand.u32 %v292, 2147483648
    %v305 = vor.u32 1.1754944e-38, %v304
    %v306 = vsel %vm303, %v305, %v301
    %v307 = vmul.f32 %v290, %v306
    %308 = vst [vmem:[#allocation10] sm:$0xff] %v307
    // Predicated region
    $region46: #{tpu_custom_call.1} parent=1 // pred_check
      _
    $region47: #{tpu_custom_call.1} parent=1 // pred_check_branch
      %310 = sbr.rel (0) target = $region49
    $region48: #{tpu_custom_call.1} parent=1 // pred_region
      %312 = vsyncadd [#allocation4], 0
      %s314 = sshll.u32 [#allocation10], 4
      %s315 = int_to_ptr.vmem [resolvable:$true] %s314
      %s316 = sshll.u32 %s7, 4
      %s317 = int_to_ptr.hbm [resolvable:$true] %s316
      %319 = dma.vmem_to_hbm [thread:$0]  %s315, 128, %s317, [#allocation4]
    $region49: #{tpu_custom_call.1} parent=1 // pred_fallthru
      _
    // Predicated region
    $region50: #{tpu_custom_call.1} parent=1 // pred_check
      _
    $region51: #{tpu_custom_call.1} parent=1 // pred_check_branch
      %321 = sbr.rel (0) target = $region53
    $region52: #{tpu_custom_call.1} parent=1 // pred_region
      %323 = dma.done [#allocation4], 128
    $region53: #{tpu_custom_call.1} parent=1 // pred_fallthru
      _
    %324 = vsyncpa [#allocation3], 1
    %325 = vsyncpa [#allocation6], 1
    %326 = vsyncpa [#allocation9], 1
    %327 = vsyncpa [#allocation4], 1

// kernel: tpu_custom_call.1
$region0: #{tpu_custom_call.1}
  #allocation0 [shape = 'u32[]', space=smem, size = 0x4, offset = 0x4, fixed_abs, tag = 'smem constant byte address 0x4 - core index']
  #allocation1 [shape = 'u32[72,128]{1,0:T(1,128)}', space=vmem, size = 0x9000, scoped, tag = 'internal scratch']
  %s0 = inlined_call_operand.hbm [shape: f32[8,16], index: 0, kind: input, shape index: {}]
  %s1 = inlined_call_operand.hbm [shape: bf16[16,128], index: 1, kind: input, shape index: {}]
  %s2 = inlined_call_operand.vmem [shape: f32[1,128], index: 2, kind: input, shape index: {}]
  %s3 = inlined_call_operand.hbm [shape: bf16[128,128], index: 3, kind: input, shape index: {}]
  %s4 = inlined_call_operand.vmem [shape: f32[1,128], index: 4, kind: input, shape index: {}]
  %s5 = inlined_call_operand.hbm [shape: bf16[128,128], index: 5, kind: input, shape index: {}]
  %s6 = inlined_call_operand.vmem [shape: f32[1,128], index: 6, kind: input, shape index: {}]
  %s7 = inlined_call_operand.hbm [shape: f32[8,128], index: 7, kind: output, shape index: {}]
  %s8 = sld [smem:[#allocation0]]
  $region54: #{tpu_custom_call.1} parent=0
    _
  %s10 = ssub.s32 1, %s8
  %s11 = scalar_select 0, %s10, %s8
  $region1: #{tpu_custom_call.1} parent=0
    #allocation2 [shape = 'u8[4096]{0}', space=vmem, size = 0x1000, scoped, tag = 'input window, operand 0, single buffered']
    #allocation3 [shape = 's32[1]{0}', space=sflag, size = 0x4, scoped, tag = 'scoped memory for tpu_custom_call.1']
    #allocation4 [shape = 's32[1]{0}', space=sflag, size = 0x4, scoped, tag = 'scoped memory for tpu_custom_call.1']
    #allocation5 [shape = 'u8[4096]{0}', space=vmem, size = 0x1000, scoped, tag = 'input window, operand 1, single buffered']
    #allocation6 [shape = 's32[1]{0}', space=sflag, size = 0x4, scoped, tag = 'scoped memory for tpu_custom_call.1']
    #allocation7 [shape = 'u8[32768]{0}', space=vmem, size = 0x8000, scoped, tag = 'input window, operand 3, single buffered']
    #allocation8 [shape = 'u8[32768]{0}', space=vmem, size = 0x8000, scoped, tag = 'input window, operand 5, single buffered']
    #allocation9 [shape = 's32[1]{0}', space=sflag, size = 0x4, scoped, tag = 'scoped memory for tpu_custom_call.1']
    #allocation10 [shape = 'u8[4096]{0}', space=vmem, size = 0x1000, scoped, tag = 'output window, operand 0, single buffered']
    %12 = vsyncpa [#allocation3], 0
    %13 = vsyncpa [#allocation6], 0
    %14 = vsyncpa [#allocation9], 0
    %15 = vsyncpa [#allocation4], 0
    // Predicated region
    $region2: #{tpu_custom_call.1} parent=1 // pred_check
      _
    $region3: #{tpu_custom_call.1} parent=1 // pred_check_branch
      %17 = sbr.rel (0) target = $region5
    $region4: #{tpu_custom_call.1} parent=1 // pred_region
      %19 = vsyncadd [#allocation3], 0
      %s21 = sshll.u32 %s0, 4
      %s22 = int_to_ptr.hbm [resolvable:$true] %s21
      %s23 = sshll.u32 [#allocation2], 4
      %s24 = int_to_ptr.vmem [resolvable:$true] %s23
      %26 = dma.hbm_to_vmem [thread:$0]  %s22, 128, %s24, [#allocation3]
    $region5: #{tpu_custom_call.1} parent=1 // pred_fallthru
      _
    // Predicated region
    $region6: #{tpu_custom_call.1} parent=1 // pred_check
      _
    $region7: #{tpu_custom_call.1} parent=1 // pred_check_branch
      %28 = sbr.rel (0) target = $region9
    $region8: #{tpu_custom_call.1} parent=1 // pred_region
      %30 = vsyncadd [#allocation6], 0
      %s31 = sshll.u32 %s1, 4
      %s32 = int_to_ptr.hbm [resolvable:$true] %s31
      %s33 = sshll.u32 [#allocation5], 4
      %s34 = int_to_ptr.vmem [resolvable:$true] %s33
      %39 = dma.hbm_to_vmem [thread:$0]  %s32, 128, %s34, [#allocation6], 64, 64, 4
    $region9: #{tpu_custom_call.1} parent=1 // pred_fallthru
      _
    // Predicated region
    $region10: #{tpu_custom_call.1} parent=1 // pred_check
      _
    $region11: #{tpu_custom_call.1} parent=1 // pred_check_branch
      %41 = sbr.rel (0) target = $region13
    $region12: #{tpu_custom_call.1} parent=1 // pred_region
      _
    $region13: #{tpu_custom_call.1} parent=1 // pred_fallthru
      _
    // Predicated region
    $region14: #{tpu_custom_call.1} parent=1 // pred_check
      _
    $region15: #{tpu_custom_call.1} parent=1 // pred_check_branch
      %43 = sbr.rel (0) target = $region17
    $region16: #{tpu_custom_call.1} parent=1 // pred_region
      %45 = vsyncadd [#allocation6], 0
      %s46 = sshll.u32 %s3, 4
      %s47 = int_to_ptr.hbm [resolvable:$true] %s46
      %s48 = sshll.u32 [#allocation7], 4
      %s49 = int_to_ptr.vmem [resolvable:$true] %s48
      %54 = dma.hbm_to_vmem [thread:$0]  %s47, 1024, %s49, [#allocation6], 64, 64, 4
    $region17: #{tpu_custom_call.1} parent=1 // pred_fallthru
      _
    // Predicated region
    $region18: #{tpu_custom_call.1} parent=1 // pred_check
      _
    $region19: #{tpu_custom_call.1} parent=1 // pred_check_branch
      %56 = sbr.rel (0) target = $region21
    $region20: #{tpu_custom_call.1} parent=1 // pred_region
      _
    $region21: #{tpu_custom_call.1} parent=1 // pred_fallthru
      _
    // Predicated region
    $region22: #{tpu_custom_call.1} parent=1 // pred_check
      _
    $region23: #{tpu_custom_call.1} parent=1 // pred_check_branch
      %58 = sbr.rel (0) target = $region25
    $region24: #{tpu_custom_call.1} parent=1 // pred_region
      %60 = vsyncadd [#allocation9], 0
      %s61 = sshll.u32 %s5, 4
      %s62 = int_to_ptr.hbm [resolvable:$true] %s61
      %s63 = sshll.u32 [#allocation8], 4
      %s64 = int_to_ptr.vmem [resolvable:$true] %s63
      %69 = dma.hbm_to_vmem [thread:$0]  %s62, 1024, %s64, [#allocation9], 64, 64, 4
    $region25: #{tpu_custom_call.1} parent=1 // pred_fallthru
      _
    // Predicated region
    $region26: #{tpu_custom_call.1} parent=1 // pred_check
      _
    $region27: #{tpu_custom_call.1} parent=1 // pred_check_branch
      %71 = sbr.rel (0) target = $region29
    $region28: #{tpu_custom_call.1} parent=1 // pred_region
      _
    $region29: #{tpu_custom_call.1} parent=1 // pred_fallthru
      _
    // Predicated region
    $region30: #{tpu_custom_call.1} parent=1 // pred_check
      _
    $region31: #{tpu_custom_call.1} parent=1 // pred_check_branch
      %73 = sbr.rel (0) target = $region33
    $region32: #{tpu_custom_call.1} parent=1 // pred_region
      %75 = dma.done [#allocation3], 128
    $region33: #{tpu_custom_call.1} parent=1 // pred_fallthru
      _
    // Predicated region
    $region34: #{tpu_custom_call.1} parent=1 // pred_check
      _
    $region35: #{tpu_custom_call.1} parent=1 // pred_check_branch
      %77 = sbr.rel (0) target = $region37
    $region36: #{tpu_custom_call.1} parent=1 // pred_region
      %79 = dma.done [#allocation6], 128
    $region37: #{tpu_custom_call.1} parent=1 // pred_fallthru
      _
    // Predicated region
    $region38: #{tpu_custom_call.1} parent=1 // pred_check
      _
    $region39: #{tpu_custom_call.1} parent=1 // pred_check_branch
      %81 = sbr.rel (0) target = $region41
    $region40: #{tpu_custom_call.1} parent=1 // pred_region
      %83 = dma.done [#allocation6], 1024
    $region41: #{tpu_custom_call.1} parent=1 // pred_fallthru
      _
    // Predicated region
    $region42: #{tpu_custom_call.1} parent=1 // pred_check
      _
    $region43: #{tpu_custom_call.1} parent=1 // pred_check_branch
      %85 = sbr.rel (0) target = $region45
    $region44: #{tpu_custom_call.1} parent=1 // pred_region
      %87 = dma.done [#allocation9], 1024
    $region45: #{tpu_custom_call.1} parent=1 // pred_fallthru
      _
    %v89 = vld [vmem:[#allocation2] sm:$0xff]
    %v90 = vpack.c.bf16 %v89, %v89
    %v91 = vld [vmem:[#allocation5] sm:$0xf]
    %v92 = vld [vmem:[#allocation5 + $0x4] sm:$0xf]
    %v93 = vld [vmem:[%s2] sm:$0x1]
    %v95 = vperm.slane %v93, 0
    %v99 = vunpack.c.l.b16 %v91
    %v100 = vunpack.c.l.b16 %v92
    %v101 = vpack.c.b16 %v100, %v99
    %vm103 = vcmask 130048
    %v105 = vsel %vm103, %v90, 0
    %107 = vmatpush.bf16.msra.mxu0 0
    %108 = vmatpush.bf16.msra.mxu0 0
    %109 = vmatpush.bf16.msra.mxu0 0
    %110 = vmatpush.bf16.msra.mxu0 0
    %111 = vmatpush.bf16.msra.mxu0 0
    %112 = vmatpush.bf16.msra.mxu0 0
    %113 = vmatpush.bf16.msra.mxu0 0
    %114 = vmatpush.bf16.msra.mxu0 %v101
    %115 = vmatmul.bf16.gmra.mxu0 %v105
    %v116 = vpop.f32.mrf.mxu0
    %v117 = vadd.f32 %v95, %v116
    %v118 = vpop.f32.mrf.mxu0
    %119 = vdwg.mxu0
    %v120 = vmax.f32 %v117, 0.0
    %v121 = vpack.c.bf16 %v120, %v120
    %v122 = vld [vmem:[#allocation7] sm:$0xf]
    %v123 = vld [vmem:[#allocation7 + $0x4] sm:$0xf]
    %v124 = vld [vmem:[#allocation7 + $0x8] sm:$0xf]
    %v125 = vld [vmem:[#allocation7 + $0xc] sm:$0xf]
    %v126 = vld [vmem:[#allocation7 + $0x10] sm:$0xf]
    %v127 = vld [vmem:[#allocation7 + $0x14] sm:$0xf]
    %v128 = vld [vmem:[#allocation7 + $0x18] sm:$0xf]
    %v129 = vld [vmem:[#allocation7 + $0x1c] sm:$0xf]
    %v130 = vld [vmem:[#allocation7 + $0x20] sm:$0xf]
    %v131 = vld [vmem:[#allocation7 + $0x24] sm:$0xf]
    %v132 = vld [vmem:[#allocation7 + $0x28] sm:$0xf]
    %v133 = vld [vmem:[#allocation7 + $0x2c] sm:$0xf]
    %v134 = vld [vmem:[#allocation7 + $0x30] sm:$0xf]
    %v135 = vld [vmem:[#allocation7 + $0x34] sm:$0xf]
    %v136 = vld [vmem:[#allocation7 + $0x38] sm:$0xf]
    %v137 = vld [vmem:[#allocation7 + $0x3c] sm:$0xf]
    %v138 = vld [vmem:[%s4] sm:$0x1]
    %v140 = vperm.slane %v138, 0
    %v158 = vunpack.c.l.b16 %v122
    %v159 = vunpack.c.l.b16 %v123
    %v160 = vunpack.c.l.b16 %v124
    %v161 = vunpack.c.l.b16 %v125
    %v162 = vunpack.c.l.b16 %v126
    %v163 = vunpack.c.l.b16 %v127
    %v164 = vunpack.c.l.b16 %v128
    %v165 = vunpack.c.l.b16 %v129
    %v166 = vunpack.c.l.b16 %v130
    %v167 = vunpack.c.l.b16 %v131
    %v168 = vunpack.c.l.b16 %v132
    %v169 = vunpack.c.l.b16 %v133
    %v170 = vunpack.c.l.b16 %v134
    %v171 = vunpack.c.l.b16 %v135
    %v172 = vunpack.c.l.b16 %v136
    %v173 = vunpack.c.l.b16 %v137
    %v174 = vpack.c.b16 %v159, %v158
    %v175 = vpack.c.b16 %v161, %v160
    %v176 = vpack.c.b16 %v163, %v162
    %v177 = vpack.c.b16 %v165, %v164
    %v178 = vpack.c.b16 %v167, %v166
    %v179 = vpack.c.b16 %v169, %v168
    %v180 = vpack.c.b16 %v171, %v170
    %v181 = vpack.c.b16 %v173, %v172
    %190 = vmatpush.bf16.msra.mxu0 %v181
    %191 = vmatpush.bf16.msra.mxu0 %v180
    %192 = vmatpush.bf16.msra.mxu0 %v179
    %193 = vmatpush.bf16.msra.mxu0 %v178
    %194 = vmatpush.bf16.msra.mxu0 %v177
    %195 = vmatpush.bf16.msra.mxu0 %v176
    %196 = vmatpush.bf16.msra.mxu0 %v175
    %197 = vmatpush.bf16.msra.mxu0 %v174
    %198 = vmatmul.bf16.gmra.mxu0 %v121
    %v199 = vpop.f32.mrf.mxu0
    %v200 = vadd.f32 %v140, %v199
    %v201 = vpop.f32.mrf.mxu0
    %202 = vdwg.mxu0
    %v203 = vmax.f32 %v200, 0.0
    %v204 = vpack.c.bf16 %v203, %v203
    %v205 = vld [vmem:[#allocation8] sm:$0xf]
    %v206 = vld [vmem:[#allocation8 + $0x4] sm:$0xf]
    %v207 = vld [vmem:[#allocation8 + $0x8] sm:$0xf]
    %v208 = vld [vmem:[#allocation8 + $0xc] sm:$0xf]
    %v209 = vld [vmem:[#allocation8 + $0x10] sm:$0xf]
    %v210 = vld [vmem:[#allocation8 + $0x14] sm:$0xf]
    %v211 = vld [vmem:[#allocation8 + $0x18] sm:$0xf]
    %v212 = vld [vmem:[#allocation8 + $0x1c] sm:$0xf]
    %v213 = vld [vmem:[#allocation8 + $0x20] sm:$0xf]
    %v214 = vld [vmem:[#allocation8 + $0x24] sm:$0xf]
    %v215 = vld [vmem:[#allocation8 + $0x28] sm:$0xf]
    %v216 = vld [vmem:[#allocation8 + $0x2c] sm:$0xf]
    %v217 = vld [vmem:[#allocation8 + $0x30] sm:$0xf]
    %v218 = vld [vmem:[#allocation8 + $0x34] sm:$0xf]
    %v219 = vld [vmem:[#allocation8 + $0x38] sm:$0xf]
    %v220 = vld [vmem:[#allocation8 + $0x3c] sm:$0xf]
    %v221 = vld [vmem:[%s6] sm:$0x1]
    %v223 = vperm.slane %v221, 0
    %v241 = vunpack.c.l.b16 %v205
    %v242 = vunpack.c.l.b16 %v206
    %v243 = vunpack.c.l.b16 %v207
    %v244 = vunpack.c.l.b16 %v208
    %v245 = vunpack.c.l.b16 %v209
    %v246 = vunpack.c.l.b16 %v210
    %v247 = vunpack.c.l.b16 %v211
    %v248 = vunpack.c.l.b16 %v212
    %v249 = vunpack.c.l.b16 %v213
    %v250 = vunpack.c.l.b16 %v214
    %v251 = vunpack.c.l.b16 %v215
    %v252 = vunpack.c.l.b16 %v216
    %v253 = vunpack.c.l.b16 %v217
    %v254 = vunpack.c.l.b16 %v218
    %v255 = vunpack.c.l.b16 %v219
    %v256 = vunpack.c.l.b16 %v220
    %v257 = vpack.c.b16 %v242, %v241
    %v258 = vpack.c.b16 %v244, %v243
    %v259 = vpack.c.b16 %v246, %v245
    %v260 = vpack.c.b16 %v248, %v247
    %v261 = vpack.c.b16 %v250, %v249
    %v262 = vpack.c.b16 %v252, %v251
    %v263 = vpack.c.b16 %v254, %v253
    %v264 = vpack.c.b16 %v256, %v255
    %273 = vmatpush.bf16.msra.mxu0 %v264
    %274 = vmatpush.bf16.msra.mxu0 %v263
    %275 = vmatpush.bf16.msra.mxu0 %v262
    %276 = vmatpush.bf16.msra.mxu0 %v261
    %277 = vmatpush.bf16.msra.mxu0 %v260
    %278 = vmatpush.bf16.msra.mxu0 %v259
    %279 = vmatpush.bf16.msra.mxu0 %v258
    %280 = vmatpush.bf16.msra.mxu0 %v257
    %281 = vmatmul.bf16.gmra.mxu0 %v204
    %v282 = vpop.f32.mrf.mxu0
    %v283 = vadd.f32 %v223, %v282
    %v284 = vpop.f32.mrf.mxu0
    %285 = vdwg.mxu0
    %286 = vmax.xlane.f32.xlu0 %v283
    %v287 = vpop.xlane.xlu0 %286
    %v288 = vsub.f32 %v283, %v287
    %v289 = vmul.f32 %v288, 1.442695
    %v290 = vpow.pop %v289
    %291 = vadd.xlane.f32.xlu0 %v290
    %v292 = vpop.xlane.xlu0 %291
    %v293 = vrcp.pop %v292
    %v294 = vmul.f32 %v292, %v293
    %v295 = vsub.f32 1.0, %v294
    %v296 = vmul.f32 %v293, %v295
    %v297 = vadd.f32 %v293, %v296
    %vm298 = vweird.f32 %v292
    %vm299 = vweird.f32 %v293
    %vm300 = vmor %vm298, %vm299
    %v301 = vsel %vm300, %v293, %v297
    %v302 = vand.u32 2147483647, %v292
    %vm303 = vcmp.eq.f32.partialorder %v302, 8.507059e+37
    %v304 = vand.u32 %v292, 2147483648
    %v305 = vor.u32 1.1754944e-38, %v304
    %v306 = vsel %vm303, %v305, %v301
    %v307 = vmul.f32 %v290, %v306
    %308 = vst [vmem:[#allocation10] sm:$0xff] %v307
    // Predicated region
    $region46: #{tpu_custom_call.1} parent=1 // pred_check
      _
    $region47: #{tpu_custom_call.1} parent=1 // pred_check_branch
      %310 = sbr.rel (0) target = $region49
    $region48: #{tpu_custom_call.1} parent=1 // pred_region
      %312 = vsyncadd [#allocation4], 0
      %s314 = sshll.u32 [#allocation10], 4
      %s315 = int_to_ptr.vmem [resolvable:$true] %s314
      %s316 = sshll.u32 %s7, 4
      %s317 = int_to_ptr.hbm [resolvable:$true] %s316
      %319 = dma.vmem_to_hbm [thread:$0]  %s315, 128, %s317, [#allocation4]
    $region49: #{tpu_custom_call.1} parent=1 // pred_fallthru
      _
    // Predicated region
    $region50: #{tpu_custom_call.1} parent=1 // pred_check
      _
    $region51: #{tpu_custom_call.1} parent=1 // pred_check_branch
      %321 = sbr.rel (0) target = $region53
    $region52: #{tpu_custom_call.1} parent=1 // pred_region
      %323 = dma.done [#allocation4], 128
    $region53: #{tpu_custom_call.1} parent=1 // pred_fallthru
      _
    %324 = vsyncpa [#allocation3], 1
    %325 = vsyncpa [#allocation6], 1
    %326 = vsyncpa [#allocation9], 1
    %327 = vsyncpa [#allocation4], 1

</llo_original>
